<compile_context>
chip_gen: v7x
topology: tpu7x:2x2x1
jax: 0.10.0
libtpu: 0.0.40
codegen_flags: <defaults>
</compile_context>

<pallas_src>
import functools
import math

import numpy as np
import jax
import jax.numpy as jnp
from jax.experimental import pallas as pl
from jax.experimental.pallas import tpu as pltpu


# ----------------------- StridedSparsityConfig (host-side, static numpy) -----------------------

def _compute_block_shape(shape, block):
    n_dim = len(shape)
    cum_prod = 1
    for i in range(n_dim - 1, -1, -1):
        cum_prod *= shape[i]
        if cum_prod > block:
            break
    assert cum_prod % block == 0, "seq tail must be divisible by block"
    new_shape = (*shape[:i], cum_prod // block)
    assert int(np.prod(new_shape)) == int(np.prod(shape)) // block
    return new_shape


def make_block_layout(shape, block, num_local_blocks, causal):
    """Strided-sparsity block layout (identical for every head): [nb, nb] in {0,1}."""
    seq_len = int(np.prod(shape))
    assert seq_len % block == 0, "seq len must be divisible by block size"
    assert num_local_blocks >= 1
    nb = seq_len // block
    layout = np.zeros((nb, nb), dtype=np.int32)

    # local blocks
    for row in range(nb):
        end = min(row + num_local_blocks, nb)
        for col in range(max(0, row - num_local_blocks), row + 1 if causal else end):
            layout[row, col] = 1

    # global (strided) blocks
    block_shape = _compute_block_shape(shape, block)
    bs = np.flip(np.array(block_shape))
    cum = tuple(int(c) for c in np.flip(np.cumprod(bs)[:-1])) + (1,)
    n_dim = len(block_shape)

    def to_flat(idx):
        return sum(idx[i] * cum[i] for i in range(n_dim))

    def to_unflat(flat):
        idx = []
        for i in range(n_dim):
            idx.append(flat // cum[i])
            flat %= cum[i]
        return tuple(idx)

    for row in range(nb):
        cur = to_unflat(row)
        for d in range(n_dim - 1):
            end = block_shape[d]
            for i in range(0, cur[d] + 1 if causal else end):
                new_idx = list(cur)
                new_idx[d] = i
                layout[row, to_flat(tuple(new_idx))] = 1
    return layout


def layout_to_col_table(layout):
    """[nb, nb] layout -> (cols [nb, max_cols] int32, counts [nb] int32).

    cols[r, :counts[r]] are the allowed key-block indices for query block r; padding
    entries repeat the last valid block (the kernel skips them via the count).
    """
    nb = layout.shape[0]
    col_lists = [np.nonzero(layout[r])[0] for r in range(nb)]
    counts = np.array([len(c) for c in col_lists], dtype=np.int32)
    max_cols = int(counts.max())
    cols = np.zeros((nb, max_cols), dtype=np.int32)
    for r, c in enumerate(col_lists):
        cols[r, : len(c)] = c
        cols[r, len(c):] = c[-1]
    return cols, counts


# ----------------------------------- Pallas kernel -----------------------------------

def _sparse_flash_kernel(cols_ref, cnt_ref,            # scalar-prefetched (SMEM)
                         q_ref, k_ref, v_ref,          # inputs (VMEM tiles)
                         o_ref,                        # output (VMEM tile)
                         m_scr, l_scr, acc_scr,        # scratch (VMEM, f32)
                         *, block, scale, causal):
    qb = pl.program_id(1)          # query block index
    j = pl.program_id(2)           # slot into the allowed-key-block list

    @pl.when(j == 0)
    def _():
        m_scr[...] = jnp.full_like(m_scr, -jnp.inf)
        l_scr[...] = jnp.zeros_like(l_scr)
        acc_scr[...] = jnp.zeros_like(acc_scr)

    @pl.when(j < cnt_ref[qb])
    def _():
        kb = cols_ref[qb, j]                                   # actual key block index
        q = q_ref[0].astype(jnp.bfloat16)                      # (block, d)
        k = k_ref[0].astype(jnp.bfloat16)                      # (block, d)
        s = jax.lax.dot_general(q, k, (((1,), (1,)), ((), ())),
                                preferred_element_type=jnp.float32) * scale
        if causal:
            row = qb * block + jax.lax.broadcasted_iota(jnp.int32, s.shape, 0)
            col = kb * block + jax.lax.broadcasted_iota(jnp.int32, s.shape, 1)
            s = jnp.where(col <= row, s, -jnp.inf)

        m_prev = m_scr[0]                                      # (block, 1)
        m_new = jnp.maximum(m_prev, jnp.max(s, axis=-1, keepdims=True))
        alpha = jnp.exp(m_prev - m_new)
        p = jnp.exp(s - m_new)                                 # (block, block) f32
        l_scr[0] = alpha * l_scr[0] + jnp.sum(p, axis=-1, keepdims=True)
        acc_scr[0] = alpha * acc_scr[0] + jnp.dot(
            p.astype(jnp.bfloat16), v_ref[0].astype(jnp.bfloat16),
            preferred_element_type=jnp.float32)
        m_scr[0] = m_new

    @pl.when(j == pl.num_programs(2) - 1)
    def _():
        o_ref[0] = (acc_scr[0] * pl.reciprocal(l_scr[0], approx=True)).astype(o_ref.dtype)


def sparse_attention_forward(q, k, v, cols, counts, *, block, causal):
    """q, k, v: [B, n_head, *shape, d_head]  ->  out with the same shape."""
    B, H = q.shape[0], q.shape[1]
    D = q.shape[-1]
    S = int(np.prod(q.shape[2:-1]))
    BH = B * H
    nb = S // block
    max_cols = cols.shape[1]

    qf = q.reshape(BH, S, D)
    kf = k.reshape(BH, S, D)
    vf = v.reshape(BH, S, D)

    kernel = functools.partial(_sparse_flash_kernel, block=block,
                               scale=1.0 / math.sqrt(D), causal=causal)

    out = pl.pallas_call(
        kernel,
        out_shape=jax.ShapeDtypeStruct((BH, S, D), q.dtype),
        grid_spec=pltpu.PrefetchScalarGridSpec(
            num_scalar_prefetch=2,
            grid=(BH, nb, max_cols),
            in_specs=[
                pl.BlockSpec((1, block, D), lambda bh, qb, j, tbl, cnt: (bh, qb, 0)),
                pl.BlockSpec((1, block, D), lambda bh, qb, j, tbl, cnt: (bh, tbl[qb, j], 0)),
                pl.BlockSpec((1, block, D), lambda bh, qb, j, tbl, cnt: (bh, tbl[qb, j], 0)),
            ],
            out_specs=pl.BlockSpec((1, block, D), lambda bh, qb, j, tbl, cnt: (bh, qb, 0)),
            scratch_shapes=[
                pltpu.VMEM((1, block, 1), jnp.float32),   # running max m
                pltpu.VMEM((1, block, 1), jnp.float32),   # running denom l
                pltpu.VMEM((1, block, D), jnp.float32),   # output accumulator
            ],
        ),
        compiler_params=pltpu.CompilerParams(
            dimension_semantics=("parallel", "parallel", "arbitrary")),
    )(cols, counts, qf, kf, vf)

    return out.reshape(q.shape)


# ----------------------------------- pure-JAX reference -----------------------------------

def reference_forward(q, k, v, layout, *, block, causal):
    B, H = q.shape[0], q.shape[1]
    D = q.shape[-1]
    S = int(np.prod(q.shape[2:-1]))
    qf = q.reshape(B, H, S, D).astype(jnp.float32)
    kf = k.reshape(B, H, S, D).astype(jnp.float32)
    vf = v.reshape(B, H, S, D).astype(jnp.float32)

    blk = np.arange(S) // block
    mask = layout[np.ix_(blk, blk)].astype(bool)
    if causal:
        mask = mask & (np.arange(S)[None, :] <= np.arange(S)[:, None])

    s = jnp.einsum("bhid,bhjd->bhij", qf, kf,
                   precision=jax.lax.Precision.HIGHEST) / math.sqrt(D)
    s = jnp.where(jnp.asarray(mask), s, -jnp.inf)
    p = jax.nn.softmax(s, axis=-1)
    o = jnp.einsum("bhij,bhjd->bhid", p, vf,
                   precision=jax.lax.Precision.HIGHEST)
    return o.reshape(q.shape)


# ----------------------------------- main -----------------------------------

if __name__ == "__main__":
    # Module configuration (small but structurally faithful): shape = (T, H, W) video
    # latents, block=32 (module default), num_local_blocks=4 (default), causal attention.
    SHAPE = (4, 8, 8)          # seq_len = 256
    BLOCK = 32                 # -> num_blocks = 8
    NUM_LOCAL_BLOCKS = 4
    CAUSAL = True
    N_HEAD = 2
    BATCH = 2
    D_HEAD = 128               # lane-dense head dim

    layout_np = make_block_layout(SHAPE, BLOCK, NUM_LOCAL_BLOCKS, CAUSAL)
    cols_np, counts_np = layout_to_col_table(layout_np)
    cols = jnp.asarray(cols_np, dtype=jnp.int32)
    counts = jnp.asarray(counts_np, dtype=jnp.int32)

    key = jax.random.PRNGKey(0)
    kq, kk, kv = jax.random.split(key, 3)
    qshape = (BATCH, N_HEAD, *SHAPE, D_HEAD)
    q = jax.random.normal(kq, qshape, jnp.float32)
    k = jax.random.normal(kk, qshape, jnp.float32)
    v = jax.random.normal(kv, qshape, jnp.float32)

    fwd = jax.jit(functools.partial(sparse_attention_forward, block=BLOCK, causal=CAUSAL))
    out = jax.block_until_ready(fwd(q, k, v, cols, counts))
    assert out.shape == qshape

    ref = jax.block_until_ready(reference_forward(q, k, v, layout_np,
                                                  block=BLOCK, causal=CAUSAL))
    # Kernel feeds bf16 to the MXU (f32 accumulation); tolerance sized accordingly.
    np.testing.assert_allclose(np.asarray(out), np.asarray(ref), rtol=2e-2, atol=2e-2)
    print("KERNEL_OK")
</pallas_src>

<mosaic_0001>
module attributes {stable_mosaic.version = 11 : i64} {
  func.func @_sparse_flash_kernel(%arg0: i32, %arg1: i32, %arg2: i32, %arg3: memref<8x6xi32, #tpu.memory_space<smem>>, %arg4: memref<8xi32, #tpu.memory_space<smem>>, %arg5: memref<1x32x128xf32, #tpu.memory_space<vmem>>, %arg6: memref<1x32x128xf32, #tpu.memory_space<vmem>>, %arg7: memref<1x32x128xf32, #tpu.memory_space<vmem>>, %arg8: memref<1x32x128xf32, #tpu.memory_space<vmem>>, %arg9: memref<1x32x1xf32, #tpu.memory_space<vmem>>, %arg10: memref<1x32x1xf32, #tpu.memory_space<vmem>>, %arg11: memref<1x32x128xf32, #tpu.memory_space<vmem>>) attributes {dimension_semantics = [#tpu.dimension_semantics<parallel>, #tpu.dimension_semantics<parallel>, #tpu.dimension_semantics<arbitrary>], iteration_bounds = array<i64: 4, 8, 6>, scalar_prefetch = 2 : i64, scratch_operands = 3 : i64, tpu.core_type = #tpu.core_type<tc>, window_params = [{transform_indices = @transform_0, window_bounds = array<i64: 1, 32, 128>}, {transform_indices = @transform_1, window_bounds = array<i64: 1, 32, 128>}, {transform_indices = @transform_2, window_bounds = array<i64: 1, 32, 128>}, {transform_indices = @transform_3, window_bounds = array<i64: 1, 32, 128>}]} {
    %c0_i32 = arith.constant 0 : i32
    %0 = arith.cmpi eq, %arg2, %c0_i32 : i32
    %1 = arith.extui %0 : i1 to i32
    %c0_i32_0 = arith.constant 0 : i32
    %2 = arith.cmpi ne, %1, %c0_i32_0 : i32
    scf.if %2 {
      %cst = arith.constant 0xFF800000 : f32
      %11 = vector.broadcast %cst : f32 to vector<1x32x1xf32>
      %c0 = arith.constant 0 : index
      %c0_3 = arith.constant 0 : index
      %c0_4 = arith.constant 0 : index
      %12 = vector.load %arg9[%c0, %c0_3, %c0_4] : memref<1x32x1xf32, #tpu.memory_space<vmem>>, vector<1x32x1xf32>
      tpu.vector_store %arg9[%c0, %c0_3, %c0_4], %11 {strides = array<i32>} : memref<1x32x1xf32, #tpu.memory_space<vmem>>, vector<1x32x1xf32>,
      %cst_5 = arith.constant 0.000000e+00 : f32
      %13 = vector.broadcast %cst_5 : f32 to vector<1x32x1xf32>
      %c0_6 = arith.constant 0 : index
      %c0_7 = arith.constant 0 : index
      %c0_8 = arith.constant 0 : index
      %14 = vector.load %arg10[%c0_6, %c0_7, %c0_8] : memref<1x32x1xf32, #tpu.memory_space<vmem>>, vector<1x32x1xf32>
      tpu.vector_store %arg10[%c0_6, %c0_7, %c0_8], %13 {strides = array<i32>} : memref<1x32x1xf32, #tpu.memory_space<vmem>>, vector<1x32x1xf32>,
      %cst_9 = arith.constant 0.000000e+00 : f32
      %15 = vector.broadcast %cst_9 : f32 to vector<1x32x128xf32>
      %c0_10 = arith.constant 0 : index
      %c0_11 = arith.constant 0 : index
      %c0_12 = arith.constant 0 : index
      %16 = vector.load %arg11[%c0_10, %c0_11, %c0_12] : memref<1x32x128xf32, #tpu.memory_space<vmem>>, vector<1x32x128xf32>
      tpu.vector_store %arg11[%c0_10, %c0_11, %c0_12], %15 {strides = array<i32>} : memref<1x32x128xf32, #tpu.memory_space<vmem>>, vector<1x32x128xf32>,
    } else {
    }
    %3 = arith.index_cast %arg1 : i32 to index
    %4 = memref.load %arg4[%3] : memref<8xi32, #tpu.memory_space<smem>>
    %5 = arith.cmpi slt, %arg2, %4 : i32
    %6 = arith.extui %5 : i1 to i32
    %c0_i32_1 = arith.constant 0 : i32
    %7 = arith.cmpi ne, %6, %c0_i32_1 : i32
    scf.if %7 {
      %11 = arith.index_cast %arg1 : i32 to index
      %12 = arith.index_cast %arg2 : i32 to index
      %13 = memref.load %arg3[%11, %12] : memref<8x6xi32, #tpu.memory_space<smem>>
      %c0 = arith.constant 0 : index
      %c0_3 = arith.constant 0 : index
      %c0_4 = arith.constant 0 : index
      %14 = vector.load %arg5[%c0, %c0_3, %c0_4] : memref<1x32x128xf32, #tpu.memory_space<vmem>>, vector<1x32x128xf32>
      %15 = vector.shape_cast %14 : vector<1x32x128xf32> to vector<32x128xf32>
      %16 = arith.truncf %15 : vector<32x128xf32> to vector<32x128xbf16>
      %c0_5 = arith.constant 0 : index
      %c0_6 = arith.constant 0 : index
      %c0_7 = arith.constant 0 : index
      %17 = vector.load %arg6[%c0_5, %c0_6, %c0_7] : memref<1x32x128xf32, #tpu.memory_space<vmem>>, vector<1x32x128xf32>
      %18 = vector.shape_cast %17 : vector<1x32x128xf32> to vector<32x128xf32>
      %19 = arith.truncf %18 : vector<32x128xf32> to vector<32x128xbf16>
      %cst = arith.constant dense<0.000000e+00> : vector<32x32xf32>
      %20 = tpu.matmul %16, %19, %cst {dimension_numbers = #tpu.dot_dimension_numbers<[1], [1], [0], [0], [0, 0, 1, 0], [], []>} : vector<32x128xbf16>, vector<32x128xbf16>, vector<32x32xf32> -> vector<32x32xf32>
      %cst_8 = arith.constant 0.0883883461 : f32
      %21 = vector.broadcast %cst_8 : f32 to vector<32x32xf32>
      %22 = arith.mulf %20, %21 : vector<32x32xf32>
      %c32_i32 = arith.constant 32 : i32
      %23 = arith.muli %arg1, %c32_i32 : i32
      %24 = tpu.iota {dimensions = array<i32: 0>} : vector<32x32xi32>
      %25 = vector.broadcast %23 : i32 to vector<32x32xi32>
      %26 = arith.addi %25, %24 : vector<32x32xi32>
      %c32_i32_9 = arith.constant 32 : i32
      %27 = arith.muli %13, %c32_i32_9 : i32
      %28 = tpu.iota {dimensions = array<i32: 1>} : vector<32x32xi32>
      %29 = vector.broadcast %27 : i32 to vector<32x32xi32>
      %30 = arith.addi %29, %28 : vector<32x32xi32>
      %31 = arith.cmpi sle, %30, %26 : vector<32x32xi32>
      %cst_10 = arith.constant 0xFF800000 : f32
      %32 = vector.broadcast %cst_10 : f32 to vector<32x32xf32>
      %33 = arith.select %31, %22, %32 : vector<32x32xi1>, vector<32x32xf32>
      %c0_11 = arith.constant 0 : index
      %c0_12 = arith.constant 0 : index
      %c0_13 = arith.constant 0 : index
      %34 = vector.load %arg9[%c0_11, %c0_12, %c0_13] : memref<1x32x1xf32, #tpu.memory_space<vmem>>, vector<1x32x1xf32>
      %35 = vector.shape_cast %34 : vector<1x32x1xf32> to vector<32x1xf32>
      %cst_14 = arith.constant dense<0xFF800000> : vector<32xf32>
      %36 = vector.multi_reduction <maximumf>, %33, %cst_14 [1] : vector<32x32xf32> to vector<32xf32>
      %37 = vector.shape_cast %36 : vector<32xf32> to vector<32x1xf32>
      %38 = arith.maximumf %35, %37 : vector<32x1xf32>
      %39 = arith.subf %35, %38 : vector<32x1xf32>
      %40 = math.exp %39 : vector<32x1xf32>
      %41 = vector.broadcast %38 : vector<32x1xf32> to vector<32x32xf32>
      %42 = arith.subf %33, %41 : vector<32x32xf32>
      %43 = math.exp %42 : vector<32x32xf32>
      %c0_15 = arith.constant 0 : index
      %c0_16 = arith.constant 0 : index
      %c0_17 = arith.constant 0 : index
      %44 = vector.load %arg10[%c0_15, %c0_16, %c0_17] : memref<1x32x1xf32, #tpu.memory_space<vmem>>, vector<1x32x1xf32>
      %45 = vector.shape_cast %44 : vector<1x32x1xf32> to vector<32x1xf32>
      %46 = arith.mulf %40, %45 : vector<32x1xf32>
      %cst_18 = arith.constant dense<0.000000e+00> : vector<32xf32>
      %47 = vector.multi_reduction <add>, %43, %cst_18 [1] : vector<32x32xf32> to vector<32xf32>
      %48 = vector.shape_cast %47 : vector<32xf32> to vector<32x1xf32>
      %49 = arith.addf %46, %48 : vector<32x1xf32>
      %c0_19 = arith.constant 0 : index
      %c0_20 = arith.constant 0 : index
      %c0_21 = arith.constant 0 : index
      %50 = vector.load %arg10[%c0_19, %c0_20, %c0_21] : memref<1x32x1xf32, #tpu.memory_space<vmem>>, vector<1x32x1xf32>
      %51 = vector.shape_cast %50 : vector<1x32x1xf32> to vector<32x1xf32>
      %52 = vector.shape_cast %49 : vector<32x1xf32> to vector<1x32x1xf32>
      tpu.vector_store %arg10[%c0_19, %c0_20, %c0_21], %52 {strides = array<i32>} : memref<1x32x1xf32, #tpu.memory_space<vmem>>, vector<1x32x1xf32>,
      %c0_22 = arith.constant 0 : index
      %c0_23 = arith.constant 0 : index
      %c0_24 = arith.constant 0 : index
      %53 = vector.load %arg11[%c0_22, %c0_23, %c0_24] : memref<1x32x128xf32, #tpu.memory_space<vmem>>, vector<1x32x128xf32>
      %54 = vector.shape_cast %53 : vector<1x32x128xf32> to vector<32x128xf32>
      %55 = vector.broadcast %40 : vector<32x1xf32> to vector<32x128xf32>
      %56 = arith.mulf %55, %54 : vector<32x128xf32>
      %57 = arith.truncf %43 : vector<32x32xf32> to vector<32x32xbf16>
      %c0_25 = arith.constant 0 : index
      %c0_26 = arith.constant 0 : index
      %c0_27 = arith.constant 0 : index
      %58 = vector.load %arg7[%c0_25, %c0_26, %c0_27] : memref<1x32x128xf32, #tpu.memory_space<vmem>>, vector<1x32x128xf32>
      %59 = vector.shape_cast %58 : vector<1x32x128xf32> to vector<32x128xf32>
      %60 = arith.truncf %59 : vector<32x128xf32> to vector<32x128xbf16>
      %cst_28 = arith.constant dense<0.000000e+00> : vector<32x128xf32>
      %61 = tpu.matmul %57, %60, %cst_28 {dimension_numbers = #tpu.dot_dimension_numbers<[1], [0], [0], [1], [0, 0, 1, 1], [], []>} : vector<32x32xbf16>, vector<32x128xbf16>, vector<32x128xf32> -> vector<32x128xf32>
      %62 = arith.addf %56, %61 : vector<32x128xf32>
      %c0_29 = arith.constant 0 : index
      %c0_30 = arith.constant 0 : index
      %c0_31 = arith.constant 0 : index
      %63 = vector.load %arg11[%c0_29, %c0_30, %c0_31] : memref<1x32x128xf32, #tpu.memory_space<vmem>>, vector<1x32x128xf32>
      %64 = vector.shape_cast %63 : vector<1x32x128xf32> to vector<32x128xf32>
      %65 = vector.shape_cast %62 : vector<32x128xf32> to vector<1x32x128xf32>
      tpu.vector_store %arg11[%c0_29, %c0_30, %c0_31], %65 {strides = array<i32>} : memref<1x32x128xf32, #tpu.memory_space<vmem>>, vector<1x32x128xf32>,
      %c0_32 = arith.constant 0 : index
      %c0_33 = arith.constant 0 : index
      %c0_34 = arith.constant 0 : index
      %66 = vector.load %arg9[%c0_32, %c0_33, %c0_34] : memref<1x32x1xf32, #tpu.memory_space<vmem>>, vector<1x32x1xf32>
      %67 = vector.shape_cast %66 : vector<1x32x1xf32> to vector<32x1xf32>
      %68 = vector.shape_cast %38 : vector<32x1xf32> to vector<1x32x1xf32>
      tpu.vector_store %arg9[%c0_32, %c0_33, %c0_34], %68 {strides = array<i32>} : memref<1x32x1xf32, #tpu.memory_space<vmem>>, vector<1x32x1xf32>,
    } else {
    }
    %c5_i32 = arith.constant 5 : i32
    %8 = arith.cmpi eq, %arg2, %c5_i32 : i32
    %9 = arith.extui %8 : i1 to i32
    %c0_i32_2 = arith.constant 0 : i32
    %10 = arith.cmpi ne, %9, %c0_i32_2 : i32
    scf.if %10 {
      %c0 = arith.constant 0 : index
      %c0_3 = arith.constant 0 : index
      %c0_4 = arith.constant 0 : index
      %11 = vector.load %arg11[%c0, %c0_3, %c0_4] : memref<1x32x128xf32, #tpu.memory_space<vmem>>, vector<1x32x128xf32>
      %12 = vector.shape_cast %11 : vector<1x32x128xf32> to vector<32x128xf32>
      %c0_5 = arith.constant 0 : index
      %c0_6 = arith.constant 0 : index
      %c0_7 = arith.constant 0 : index
      %13 = vector.load %arg10[%c0_5, %c0_6, %c0_7] : memref<1x32x1xf32, #tpu.memory_space<vmem>>, vector<1x32x1xf32>
      %14 = vector.shape_cast %13 : vector<1x32x1xf32> to vector<32x1xf32>
      %15 = tpu.reciprocal %14 {approx = true} : vector<32x1xf32> -> vector<32x1xf32>
      %16 = vector.broadcast %15 : vector<32x1xf32> to vector<32x128xf32>
      %17 = arith.mulf %12, %16 : vector<32x128xf32>
      %c0_8 = arith.constant 0 : index
      %c0_9 = arith.constant 0 : index
      %c0_10 = arith.constant 0 : index
      %18 = vector.load %arg8[%c0_8, %c0_9, %c0_10] : memref<1x32x128xf32, #tpu.memory_space<vmem>>, vector<1x32x128xf32>
      %19 = vector.shape_cast %18 : vector<1x32x128xf32> to vector<32x128xf32>
      %20 = vector.shape_cast %17 : vector<32x128xf32> to vector<1x32x128xf32>
      tpu.vector_store %arg8[%c0_8, %c0_9, %c0_10], %20 {strides = array<i32>} : memref<1x32x128xf32, #tpu.memory_space<vmem>>, vector<1x32x128xf32>,
    } else {
    }
    return
  }
  func.func @transform_0(%arg0: i32, %arg1: i32, %arg2: i32, %arg3: memref<8x6xi32, #tpu.memory_space<smem>>, %arg4: memref<8xi32, #tpu.memory_space<smem>>) -> (i32, i32, i32) {
    %c0_i32 = arith.constant 0 : i32
    %c0_i32_0 = arith.constant 0 : i32
    return %arg0, %arg1, %c0_i32 : i32, i32, i32
  }
  func.func @transform_1(%arg0: i32, %arg1: i32, %arg2: i32, %arg3: memref<8x6xi32, #tpu.memory_space<smem>>, %arg4: memref<8xi32, #tpu.memory_space<smem>>) -> (i32, i32, i32) {
    %0 = arith.index_cast %arg1 : i32 to index
    %1 = arith.index_cast %arg2 : i32 to index
    %2 = memref.load %arg3[%0, %1] : memref<8x6xi32, #tpu.memory_space<smem>>
    %c0_i32 = arith.constant 0 : i32
    %c0_i32_0 = arith.constant 0 : i32
    return %arg0, %2, %c0_i32 : i32, i32, i32
  }
  func.func @transform_2(%arg0: i32, %arg1: i32, %arg2: i32, %arg3: memref<8x6xi32, #tpu.memory_space<smem>>, %arg4: memref<8xi32, #tpu.memory_space<smem>>) -> (i32, i32, i32) {
    %0 = arith.index_cast %arg1 : i32 to index
    %1 = arith.index_cast %arg2 : i32 to index
    %2 = memref.load %arg3[%0, %1] : memref<8x6xi32, #tpu.memory_space<smem>>
    %c0_i32 = arith.constant 0 : i32
    %c0_i32_0 = arith.constant 0 : i32
    return %arg0, %2, %c0_i32 : i32, i32, i32
  }
  func.func @transform_3(%arg0: i32, %arg1: i32, %arg2: i32, %arg3: memref<8x6xi32, #tpu.memory_space<smem>>, %arg4: memref<8xi32, #tpu.memory_space<smem>>) -> (i32, i32, i32) {
    %c0_i32 = arith.constant 0 : i32
    %c0_i32_0 = arith.constant 0 : i32
    return %arg0, %arg1, %c0_i32 : i32, i32, i32
  }
}

</mosaic_0001>

<llo_original>
// kernel: sparse_attention_forward.1
$region0: #{sparse_attention_forward.1}
  #allocation0 [shape = 'u32[]', space=smem, size = 0x4, offset = 0x4, fixed_abs, tag = 'smem constant byte address 0x4 - core index']
  #allocation1 [shape = 'u32[144,128]{1,0:T(1,128)}', space=vmem, size = 0x12000, scoped, tag = 'internal scratch']
  #allocation2 [shape = 'f32[1,32,1]{2,1,0:T(8,128)}', space=vmem, size = 0x4000, scoped, tag = 'scratch operand']
  #allocation3 [shape = 'f32[1,32,1]{2,1,0:T(8,128)}', space=vmem, size = 0x4000, scoped, tag = 'scratch operand']
  #allocation4 [shape = 'f32[1,32,128]{2,1,0:T(8,128)}', space=vmem, size = 0x4000, scoped, tag = 'scratch operand']
  #allocation5 [shape = 's32[1]{0}', space=sflag, size = 0x4, scoped, tag = 'scoped memory for sparse_attention_forward.1']
  #allocation6 [shape = 'u8[4096]{0}', space=smem, size = 0x1000, scoped, tag = 'prefetched SMEM operand 0']
  #allocation7 [shape = 'u8[512]{0}', space=smem, size = 0x200, scoped, tag = 'prefetched SMEM operand 1']
  %s0 = inlined_call_operand.vmem [shape: s32[8,6], index: 0, kind: input, shape index: {}]
  %s1 = inlined_call_operand.vmem [shape: s32[8], index: 1, kind: input, shape index: {}]
  %s2 = inlined_call_operand.hbm [shape: f32[4,256,128], index: 2, kind: input, shape index: {}]
  %s3 = inlined_call_operand.hbm [shape: f32[4,256,128], index: 3, kind: input, shape index: {}]
  %s4 = inlined_call_operand.hbm [shape: f32[4,256,128], index: 4, kind: input, shape index: {}]
  %s5 = inlined_call_operand.hbm [shape: f32[4,256,128], index: 5, kind: output, shape index: {}]
  %s6 = sld [smem:[#allocation0]]
  $region69: #{sparse_attention_forward.1} parent=0
    _
  %s8 = ssub.s32 1, %s6
  %s9 = scalar_select 0, %s8, %s6
  %s10 = sshll.u32 %s0, 4
  %s11 = int_to_ptr.vmem [resolvable:$true] %s10
  %13 = dma.vmem_to_smem %s11, 128, [#allocation6], [#allocation5]
  %s14 = sshll.u32 %s1, 4
  %s15 = int_to_ptr.vmem [resolvable:$true] %s14
  %17 = dma.vmem_to_smem %s15, 16, [#allocation7], [#allocation5]
  %18 = dma.done [#allocation5], 144
  %19 = sfence
  $region1: #{sparse_attention_forward.1} parent=0
    #allocation8 [shape = 'u8[32768]{0}', space=vmem, size = 0x8000, scoped, tag = 'input window, operand 2']
    #allocation9 [shape = 's32[2]{0}', space=sflag, size = 0x8, scoped, tag = 'scoped memory for sparse_attention_forward.1']
    #allocation10 [shape = 's32[2]{0}', space=sflag, size = 0x8, scoped, tag = 'scoped memory for sparse_attention_forward.1']
    #allocation11 [shape = 'u8[32768]{0}', space=vmem, size = 0x8000, scoped, tag = 'input window, operand 3']
    #allocation12 [shape = 's32[2]{0}', space=sflag, size = 0x8, scoped, tag = 'scoped memory for sparse_attention_forward.1']
    #allocation13 [shape = 'u8[32768]{0}', space=vmem, size = 0x8000, scoped, tag = 'input window, operand 4']
    #allocation14 [shape = 'u8[32768]{0}', space=vmem, size = 0x8000, scoped, tag = 'output window, operand 0']
    %20 = vsyncpa [#allocation9], 0
    %s21 = scalar_lea.sflag [#allocation9], 1
    %22 = vsyncpa %s21, 0
    %23 = vsyncpa [#allocation12], 0
    %s24 = scalar_lea.sflag [#allocation12], 1
    %25 = vsyncpa %s24, 0
    %26 = vsyncpa [#allocation10], 0
    %s27 = scalar_lea.sflag [#allocation10], 1
    %28 = vsyncpa %s27, 0
    loop: start=0, step=1, limit=194
    $region2: #{sparse_attention_forward.1} parent=1 // loop_pre_header
      _
    $region3: #{sparse_attention_forward.1} parent=1 // loop_header
      %s30 = sphi 0, %s34
      %p31 = scmp.ge.s32.totalorder %s30, 194
      %s37 = sphi 0, %s56
      %s38 = sphi 0, %s52
      %s39 = sphi 0, %s48
      %s40 = sphi 0, %s37
      %s41 = sphi 0, %s38
      %s42 = sphi 0, %s39
      %s43 = sphi 0, %s40
      %s44 = sphi 0, %s41
      %s45 = sphi 0, %s42
      %s61 = sphi 0, %s63
      %s64 = sphi 0, %s61
      %s65 = sphi 0, %s64
      %s81 = sphi 0, %s65
      %s105 = sphi 0, %s107
      %s108 = sphi 0, %s105
      %s109 = sphi 0, %s108
      %s125 = sphi 0, %s109
      %s149 = sphi 0, %s151
      %s152 = sphi 0, %s149
      %s153 = sphi 0, %s152
      %s169 = sphi 0, %s153
      %s177 = sphi 0, %s179
      %s180 = sphi 0, %s177
      %s181 = sphi 0, %s180
      %s197 = sphi 0, %s181
    $region4: #{sparse_attention_forward.1} parent=1 // loop_header_branch
      %33 = sbr.rel (%p31) target = $region8
    $region5: #{sparse_attention_forward.1} parent=1 // loop_body
      %s35 = ssub.s32 %s30, 1
      %s36 = ssub.s32 %s30, 2
      %s46 = sadd.s32 1, %s39
      %p47 = scmp.ge.s32.totalorder %s46, 6
      %s48 = scalar_select %p47, 0, %s46
      %s49 = sadd.s32 1, %s38
      %s50 = scalar_select %p47, %s49, %s38
      %p51 = scmp.ge.s32.totalorder %s50, 8
      %s52 = scalar_select %p51, 0, %s50
      %s53 = sadd.s32 1, %s37
      %s54 = scalar_select %p51, %s53, %s37
      %p55 = scmp.ge.s32.totalorder %s54, 4
      %s56 = scalar_select %p55, 0, %s54
      %s57 = ssub.s32 %s37, %s56
      %s58 = ssub.s32 %s38, %s52
      %s59 = sor.u32 %s57, %s58
      %p60 = scmp.eq.s32.totalorder %s59, 0
      %s62 = sadd.s32 %s61, 1
      %s63 = scalar_select %p60, %s61, %s62
      %p66 = pneg %p60
      %p67 = scmp.eq.s32.totalorder %s30, 191
      %p68 = por %p66, %p67
      %p69 = scmp.ne.s32.totalorder %s61, %s64
      %p70 = scmp.eq.s32.totalorder %s30, 0
      %p71 = por %p69, %p70
      %p72 = scmp.ne.s32.totalorder %s61, %s64
      %p73 = scmp.eq.s32.totalorder %s35, 191
      %p74 = por %p72, %p73
      %p75 = scmp.ne.s32.totalorder %s64, %s65
      %p76 = scmp.eq.s32.totalorder %s35, 0
      %p77 = por %p75, %p76
      %p78 = scmp.ne.s32.totalorder %s64, %s65
      %p79 = scmp.eq.s32.totalorder %s36, 191
      %p80 = por %p78, %p79
      %p82 = scmp.ne.s32.totalorder %s65, %s81
      %p83 = scmp.eq.s32.totalorder %s36, 0
      %p84 = por %p82, %p83
      %s85 = sshra.s32 %s39, 7
      %s86 = sand.u32 %s39, 127
      %s87 = sadd.s32 %s85, %s38
      %s88 = smul.u32 %s87, 128
      %s89 = sshra.s32 %s39, 7
      %s90 = sand.u32 %s39, 127
      %s91 = sadd.s32 %s88, %s90
      %s92 = sld [smem:[#allocation6 + %s91]]
      %s93 = sshra.s32 %s48, 7
      %s94 = sand.u32 %s48, 127
      %s95 = sadd.s32 %s93, %s52
      %s96 = smul.u32 %s95, 128
      %s97 = sshra.s32 %s48, 7
      %s98 = sand.u32 %s48, 127
      %s99 = sadd.s32 %s96, %s98
      %s100 = sld [smem:[#allocation6 + %s99]]
      %s101 = ssub.s32 %s37, %s56
      %s102 = ssub.s32 %s92, %s100
      %s103 = sor.u32 %s101, %s102
      %p104 = scmp.eq.s32.totalorder %s103, 0
      %s106 = sadd.s32 %s105, 1
      %s107 = scalar_select %p104, %s105, %s106
      %p110 = pneg %p104
      %p111 = scmp.eq.s32.totalorder %s30, 191
      %p112 = por %p110, %p111
      %p113 = scmp.ne.s32.totalorder %s105, %s108
      %p114 = scmp.eq.s32.totalorder %s30, 0
      %p115 = por %p113, %p114
      %p116 = scmp.ne.s32.totalorder %s105, %s108
      %p117 = scmp.eq.s32.totalorder %s35, 191
      %p118 = por %p116, %p117
      %p119 = scmp.ne.s32.totalorder %s108, %s109
      %p120 = scmp.eq.s32.totalorder %s35, 0
      %p121 = por %p119, %p120
      %p122 = scmp.ne.s32.totalorder %s108, %s109
      %p123 = scmp.eq.s32.totalorder %s36, 191
      %p124 = por %p122, %p123
      %p126 = scmp.ne.s32.totalorder %s109, %s125
      %p127 = scmp.eq.s32.totalorder %s36, 0
      %p128 = por %p126, %p127
      %s129 = sshra.s32 %s39, 7
      %s130 = sand.u32 %s39, 127
      %s131 = sadd.s32 %s129, %s38
      %s132 = smul.u32 %s131, 128
      %s133 = sshra.s32 %s39, 7
      %s134 = sand.u32 %s39, 127
      %s135 = sadd.s32 %s132, %s134
      %s136 = sld [smem:[#allocation6 + %s135]]
      %s137 = sshra.s32 %s48, 7
      %s138 = sand.u32 %s48, 127
      %s139 = sadd.s32 %s137, %s52
      %s140 = smul.u32 %s139, 128
      %s141 = sshra.s32 %s48, 7
      %s142 = sand.u32 %s48, 127
      %s143 = sadd.s32 %s140, %s142
      %s144 = sld [smem:[#allocation6 + %s143]]
      %s145 = ssub.s32 %s37, %s56
      %s146 = ssub.s32 %s136, %s144
      %s147 = sor.u32 %s145, %s146
      %p148 = scmp.eq.s32.totalorder %s147, 0
      %s150 = sadd.s32 %s149, 1
      %s151 = scalar_select %p148, %s149, %s150
      %p154 = pneg %p148
      %p155 = scmp.eq.s32.totalorder %s30, 191
      %p156 = por %p154, %p155
      %p157 = scmp.ne.s32.totalorder %s149, %s152
      %p158 = scmp.eq.s32.totalorder %s30, 0
      %p159 = por %p157, %p158
      %p160 = scmp.ne.s32.totalorder %s149, %s152
      %p161 = scmp.eq.s32.totalorder %s35, 191
      %p162 = por %p160, %p161
      %p163 = scmp.ne.s32.totalorder %s152, %s153
      %p164 = scmp.eq.s32.totalorder %s35, 0
      %p165 = por %p163, %p164
      %p166 = scmp.ne.s32.totalorder %s152, %s153
      %p167 = scmp.eq.s32.totalorder %s36, 191
      %p168 = por %p166, %p167
      %p170 = scmp.ne.s32.totalorder %s153, %s169
      %p171 = scmp.eq.s32.totalorder %s36, 0
      %p172 = por %p170, %p171
      %s173 = ssub.s32 %s37, %s56
      %s174 = ssub.s32 %s38, %s52
      %s175 = sor.u32 %s173, %s174
      %p176 = scmp.eq.s32.totalorder %s175, 0
      %s178 = sadd.s32 %s177, 1
      %s179 = scalar_select %p176, %s177, %s178
      %p182 = pneg %p176
      %p183 = scmp.eq.s32.totalorder %s30, 191
      %p184 = por %p182, %p183
      %p185 = scmp.ne.s32.totalorder %s177, %s180
      %p186 = scmp.eq.s32.totalorder %s30, 0
      %p187 = por %p185, %p186
      %p188 = scmp.ne.s32.totalorder %s177, %s180
      %p189 = scmp.eq.s32.totalorder %s35, 191
      %p190 = por %p188, %p189
      %p191 = scmp.ne.s32.totalorder %s180, %s181
      %p192 = scmp.eq.s32.totalorder %s35, 0
      %p193 = por %p191, %p192
      %p194 = scmp.ne.s32.totalorder %s180, %s181
      %p195 = scmp.eq.s32.totalorder %s36, 191
      %p196 = por %p194, %p195
      %p198 = scmp.ne.s32.totalorder %s181, %s197
      %p199 = scmp.eq.s32.totalorder %s36, 0
      %p200 = por %p198, %p199
      %p201 = scmp.le.s32.totalorder 1, %s30
      %p202 = scmp.lt.s32.totalorder %s30, 193
      %p203 = pnand %p201, %p202
      %p204 = pneg %p203
      // Predicated region
      $region9: #{sparse_attention_forward.1} parent=5 // pred_check
        _
      $region10: #{sparse_attention_forward.1} parent=5 // pred_check_branch
        %206 = sbr.rel (%p203) target = $region12
      $region11: #{sparse_attention_forward.1} parent=5 // pred_region
        %s207 = ssub.s32 %s30, 1
      $region12: #{sparse_attention_forward.1} parent=5 // pred_fallthru
        _
      %p208 = scmp.lt.s32.totalorder %s30, 192
      // Predicated region
      $region13: #{sparse_attention_forward.1} parent=5 // pred_check
        %p209 = pneg %p208
      $region14: #{sparse_attention_forward.1} parent=5 // pred_check_branch
        %211 = sbr.rel (%p209) target = $region16
      $region15: #{sparse_attention_forward.1} parent=5 // pred_region
        // Predicated region
        $region17: #{sparse_attention_forward.1} parent=15 // pred_check
          %p212 = pneg %p71
        $region18: #{sparse_attention_forward.1} parent=15 // pred_check_branch
          %214 = sbr.rel (%p212) target = $region20
        $region19: #{sparse_attention_forward.1} parent=15 // pred_region
          %s215 = sand.u32 %s61, 1
          %s216 = scalar_lea.sflag [#allocation9], %s215
          %s217 = sand.u32 %s61, 1
          %s218 = smul.addr %s217, 32
          %s219 = scalar_lea.vmem [#allocation8], %s218
          %s220 = smul.u32 4, %s38
          %s222 = ssub.s32 512, 512
          %223 = vsyncadd %s216, %s222
          %s224 = smul.addr %s37, 32
          %s225 = sadd.s32 %s220, %s224
          %s226 = smul.addr %s225, 128
          %s227 = scalar_lea.hbm %s2, %s226
          %s228 = sshll.u32 %s219, 4
          %s229 = int_to_ptr.vmem [resolvable:$true] %s228
          %234 = dma.hbm_to_vmem [thread:$0]  %s227, 512, %s229, %s216, 128, 128, 8
        $region20: #{sparse_attention_forward.1} parent=15 // pred_fallthru
          _
        // Predicated region
        $region21: #{sparse_attention_forward.1} parent=15 // pred_check
          %p235 = pneg %p115
        $region22: #{sparse_attention_forward.1} parent=15 // pred_check_branch
          %237 = sbr.rel (%p235) target = $region24
        $region23: #{sparse_attention_forward.1} parent=15 // pred_region
          %s238 = sand.u32 %s30, 1
          %s239 = scalar_lea.sflag [#allocation12], %s238
          %s240 = sand.u32 %s105, 1
          %s241 = smul.addr %s240, 32
          %s242 = scalar_lea.vmem [#allocation11], %s241
          %s243 = sshra.s32 %s39, 7
          %s244 = sand.u32 %s39, 127
          %s245 = sadd.s32 %s243, %s38
          %s246 = smul.u32 %s245, 128
          %s247 = sshra.s32 %s39, 7
          %s248 = sand.u32 %s39, 127
          %s249 = sadd.s32 %s246, %s248
          %s250 = sld [smem:[#allocation6 + %s249]]
          %s251 = smul.u32 4, %s250
          %s253 = ssub.s32 512, 512
          %254 = vsyncadd %s239, %s253
          %s255 = smul.addr %s37, 32
          %s256 = sadd.s32 %s251, %s255
          %s257 = smul.addr %s256, 128
          %s258 = scalar_lea.hbm %s3, %s257
          %s259 = sshll.u32 %s242, 4
          %s260 = int_to_ptr.vmem [resolvable:$true] %s259
          %265 = dma.hbm_to_vmem [thread:$0]  %s258, 512, %s260, %s239, 128, 128, 8
        $region24: #{sparse_attention_forward.1} parent=15 // pred_fallthru
          _
        // Predicated region
        $region25: #{sparse_attention_forward.1} parent=15 // pred_check
          %p266 = pneg %p159
        $region26: #{sparse_attention_forward.1} parent=15 // pred_check_branch
          %268 = sbr.rel (%p266) target = $region28
        $region27: #{sparse_attention_forward.1} parent=15 // pred_region
          %s269 = sand.u32 %s30, 1
          %s270 = scalar_lea.sflag [#allocation12], %s269
          %s271 = sand.u32 %s149, 1
          %s272 = smul.addr %s271, 32
          %s273 = scalar_lea.vmem [#allocation13], %s272
          %s274 = sshra.s32 %s39, 7
          %s275 = sand.u32 %s39, 127
          %s276 = sadd.s32 %s274, %s38
          %s277 = smul.u32 %s276, 128
          %s278 = sshra.s32 %s39, 7
          %s279 = sand.u32 %s39, 127
          %s280 = sadd.s32 %s277, %s279
          %s281 = sld [smem:[#allocation6 + %s280]]
          %s282 = smul.u32 4, %s281
          %s284 = ssub.s32 512, 512
          %285 = vsyncadd %s270, %s284
          %s286 = smul.addr %s37, 32
          %s287 = sadd.s32 %s282, %s286
          %s288 = smul.addr %s287, 128
          %s289 = scalar_lea.hbm %s4, %s288
          %s290 = sshll.u32 %s273, 4
          %s291 = int_to_ptr.vmem [resolvable:$true] %s290
          %296 = dma.hbm_to_vmem [thread:$0]  %s289, 512, %s291, %s270, 128, 128, 8
        $region28: #{sparse_attention_forward.1} parent=15 // pred_fallthru
          _
      $region16: #{sparse_attention_forward.1} parent=5 // pred_fallthru
        _
      %p297 = scmp.le.s32.totalorder 1, %s30
      %p298 = scmp.lt.s32.totalorder %s30, 193
      %p299 = pnand %p297, %p298
      %p300 = pneg %p299
      // Predicated region
      $region29: #{sparse_attention_forward.1} parent=5 // pred_check
        _
      $region30: #{sparse_attention_forward.1} parent=5 // pred_check_branch
        %302 = sbr.rel (%p299) target = $region32
      $region31: #{sparse_attention_forward.1} parent=5 // pred_region
        %s303 = ssub.s32 %s30, 1
        %s304 = sand.u32 %s64, 1
        %s305 = scalar_lea.sflag [#allocation9], %s304
        %s306 = sand.u32 %s64, 1
        %s307 = smul.addr %s306, 32
        %s308 = scalar_lea.vmem [#allocation8], %s307
        // Predicated region
        $region33: #{sparse_attention_forward.1} parent=31 // pred_check
          %p309 = pneg %p77
        $region34: #{sparse_attention_forward.1} parent=31 // pred_check_branch
          %311 = sbr.rel (%p309) target = $region36
        $region35: #{sparse_attention_forward.1} parent=31 // pred_region
          %312 = dma.done %s305, 512
        $region36: #{sparse_attention_forward.1} parent=31 // pred_fallthru
          _
        %s313 = sand.u32 %s35, 1
        %s314 = scalar_lea.sflag [#allocation12], %s313
        %s315 = sand.u32 %s108, 1
        %s316 = smul.addr %s315, 32
        %s317 = scalar_lea.vmem [#allocation11], %s316
        // Predicated region
        $region37: #{sparse_attention_forward.1} parent=31 // pred_check
          %p318 = pneg %p121
        $region38: #{sparse_attention_forward.1} parent=31 // pred_check_branch
          %320 = sbr.rel (%p318) target = $region40
        $region39: #{sparse_attention_forward.1} parent=31 // pred_region
          %321 = dma.done %s314, 512
        $region40: #{sparse_attention_forward.1} parent=31 // pred_fallthru
          _
        %s322 = sand.u32 %s35, 1
        %s323 = scalar_lea.sflag [#allocation12], %s322
        %s324 = sand.u32 %s152, 1
        %s325 = smul.addr %s324, 32
        %s326 = scalar_lea.vmem [#allocation13], %s325
        // Predicated region
        $region41: #{sparse_attention_forward.1} parent=31 // pred_check
          %p327 = pneg %p165
        $region42: #{sparse_attention_forward.1} parent=31 // pred_check_branch
          %329 = sbr.rel (%p327) target = $region44
        $region43: #{sparse_attention_forward.1} parent=31 // pred_region
          %330 = dma.done %s323, 512
        $region44: #{sparse_attention_forward.1} parent=31 // pred_fallthru
          _
        %s331 = sand.u32 %s64, 1
        %s332 = scalar_lea.sflag [#allocation9], %s331
        %s333 = sand.u32 %s64, 1
        %s334 = smul.addr %s333, 32
        %s335 = scalar_lea.vmem [#allocation8], %s334
        %p336 = pneg %p77
        %p337 = pneg %p74
        %s338 = sand.u32 %s35, 1
        %s339 = scalar_lea.sflag [#allocation12], %s338
        %s340 = sand.u32 %s108, 1
        %s341 = smul.addr %s340, 32
        %s342 = scalar_lea.vmem [#allocation11], %s341
        %p343 = pneg %p121
        %p344 = pneg %p118
        %s345 = sand.u32 %s35, 1
        %s346 = scalar_lea.sflag [#allocation12], %s345
        %s347 = sand.u32 %s152, 1
        %s348 = smul.addr %s347, 32
        %s349 = scalar_lea.vmem [#allocation13], %s348
        %p350 = pneg %p165
        %p351 = pneg %p162
        %p352 = pneg %p193
        %p353 = pneg %p190
        %s354 = sand.u32 %s180, 1
        %s355 = scalar_lea.sflag [#allocation10], %s354
        %s356 = sand.u32 %s180, 1
        %s357 = smul.addr %s356, 32
        %s358 = scalar_lea.vmem [#allocation14], %s357
        %s359 = smul.u32 4, %s41
        %s360 = sshra.s32 %s42, 7
        %s361 = sand.u32 %s42, 127
        %s362 = sadd.s32 %s360, %s41
        %s363 = smul.u32 %s362, 128
        %s364 = sshra.s32 %s42, 7
        %s365 = sand.u32 %s42, 127
        %s366 = sadd.s32 %s363, %s365
        %s367 = sld [smem:[#allocation6 + %s366]]
        %s368 = smul.u32 4, %s367
        %s369 = sshra.s32 %s42, 7
        %s370 = sand.u32 %s42, 127
        %s371 = sadd.s32 %s369, %s41
        %s372 = smul.u32 %s371, 128
        %s373 = sshra.s32 %s42, 7
        %s374 = sand.u32 %s42, 127
        %s375 = sadd.s32 %s372, %s374
        %s376 = sld [smem:[#allocation6 + %s375]]
        %s377 = smul.u32 4, %s376
        %s378 = smul.u32 4, %s41
        %p380 = scmp.eq.s32.totalorder %s42, 0
        // Predicated region
        $region45: #{sparse_attention_forward.1} parent=31 // pred_check
          %p381 = pneg %p380
        $region46: #{sparse_attention_forward.1} parent=31 // pred_check_branch
          %383 = sbr.rel (%p381) target = $region48
        $region47: #{sparse_attention_forward.1} parent=31 // pred_region
          %vm384 = vcmask 7168
          %385 = vst.msk [vmem:[#allocation2] sm:$0xff] %vm384, -inf
          %386 = vst.msk [vmem:[#allocation2 + $0x8] sm:$0xff] %vm384, -inf
          %387 = vst.msk [vmem:[#allocation2 + $0x10] sm:$0xff] %vm384, -inf
          %388 = vst.msk [vmem:[#allocation2 + $0x18] sm:$0xff] %vm384, -inf
          %389 = vst.msk [vmem:[#allocation3] sm:$0xff] %vm384, 0.0
          %390 = vst.msk [vmem:[#allocation3 + $0x8] sm:$0xff] %vm384, 0.0
          %391 = vst.msk [vmem:[#allocation3 + $0x10] sm:$0xff] %vm384, 0.0
          %392 = vst.msk [vmem:[#allocation3 + $0x18] sm:$0xff] %vm384, 0.0
          %393 = vst [vmem:[#allocation4] sm:$0xff] 0.0
          %394 = vst [vmem:[#allocation4 + $0x8] sm:$0xff] 0.0
          %395 = vst [vmem:[#allocation4 + $0x10] sm:$0xff] 0.0
          %396 = vst [vmem:[#allocation4 + $0x18] sm:$0xff] 0.0
        $region48: #{sparse_attention_forward.1} parent=31 // pred_fallthru
          _
        %s397 = sld [smem:[#allocation7 + %s41]]
        %p398 = scmp.lt.s32.totalorder %s42, %s397
        // Predicated region
        $region49: #{sparse_attention_forward.1} parent=31 // pred_check
          %p399 = pneg %p398
        $region50: #{sparse_attention_forward.1} parent=31 // pred_check_branch
          %401 = sbr.rel (%p399) target = $region52
        $region51: #{sparse_attention_forward.1} parent=31 // pred_region
          %s402 = sshra.s32 %s42, 7
          %s403 = sand.u32 %s42, 127
          %s404 = sadd.s32 %s402, %s41
          %s405 = smul.u32 %s404, 128
          %s406 = sshra.s32 %s42, 7
          %s407 = sand.u32 %s42, 127
          %s408 = sadd.s32 %s405, %s407
          %s409 = sld [smem:[#allocation6 + %s408]]
          %v410 = vld [vmem:[%s308] sm:$0xff]
          %v411 = vld [vmem:[%s308 + $0x8] sm:$0xff]
          %v412 = vld [vmem:[%s308 + $0x10] sm:$0xff]
          %v413 = vld [vmem:[%s308 + $0x18] sm:$0xff]
          %v414 = vpack.c.bf16 %v411, %v410
          %v415 = vpack.c.bf16 %v413, %v412
          %v416 = vld [vmem:[%s317] sm:$0xff]
          %v417 = vld [vmem:[%s317 + $0x8] sm:$0xff]
          %v418 = vld [vmem:[%s317 + $0x10] sm:$0xff]
          %v419 = vld [vmem:[%s317 + $0x18] sm:$0xff]
          %v420 = vpack.c.bf16 %v417, %v416
          %v421 = vpack.c.bf16 %v419, %v418
          %422 = vmatprep.subr.bf16.mxu0 0
          %423 = vmatpush1.bf16.xpose.msra.mxu0 %v420
          %424 = vmatprep.subr.bf16.mxu0 0
          %425 = vmatpush1.bf16.xpose.msra.mxu0 %v421
          %426 = vmatprep.subr.bf16.mxu0 0
          %427 = vmatpush1.bf16.xpose.msra.mxu0 0
          %428 = vmatprep.subr.bf16.mxu0 0
          %429 = vmatpush1.bf16.xpose.msra.mxu0 0
          %430 = vmatprep.subr.bf16.mxu0 0
          %431 = vmatpush1.bf16.xpose.msra.mxu0 0
          %432 = vmatprep.subr.bf16.mxu0 0
          %433 = vmatpush1.bf16.xpose.msra.mxu0 0
          %434 = vmatprep.subr.bf16.mxu0 0
          %435 = vmatpush1.bf16.xpose.msra.mxu0 0
          %436 = vmatprep.subr.bf16.mxu0 0
          %437 = vmatpush1.bf16.xpose.msra.mxu0 0
          %438 = vmatprep.subr.bf16.mxu0 0
          %439 = vmatpush1.bf16.xpose.msra.mxu0 0
          %440 = vmatprep.subr.bf16.mxu0 0
          %441 = vmatpush1.bf16.xpose.msra.mxu0 0
          %442 = vmatprep.subr.bf16.mxu0 0
          %443 = vmatpush1.bf16.xpose.msra.mxu0 0
          %444 = vmatprep.subr.bf16.mxu0 0
          %445 = vmatpush1.bf16.xpose.msra.mxu0 0
          %446 = vmatprep.subr.bf16.mxu0 0
          %447 = vmatpush1.bf16.xpose.msra.mxu0 0
          %448 = vmatprep.subr.bf16.mxu0 0
          %449 = vmatpush1.bf16.xpose.msra.mxu0 0
          %450 = vmatprep.subr.bf16.mxu0 0
          %451 = vmatpush1.bf16.xpose.msra.mxu0 0
          %452 = vmatprep.subr.bf16.mxu0 0
          %453 = vmatpush1.bf16.xpose.msra.mxu0 0
          %454 = vmatprep.mubr.bf16.mxu0 0
          %455 = vmatmul.mubr.bf16.gmra.mrb[0].mxu0 %v414
          %v456 = vpop.f32.mrb[0].mxu0
          %v457 = vadd.f32 0.0, %v456
          %v458 = vpop.f32.mrb[0].mxu0
          %v459 = vpop.f32.mrb[0].mxu0
          %v460 = vadd.f32 0.0, %v459
          %v461 = vpop.f32.mrb[0].mxu0
          %462 = vmatprep.mubr.bf16.mxu0 0
          %463 = vmatmul.mubr.bf16.gmra.mrb[0].mxu0 %v415
          %v464 = vpop.f32.mrb[0].mxu0
          %v465 = vadd.f32 0.0, %v464
          %v466 = vpop.f32.mrb[0].mxu0
          %v467 = vpop.f32.mrb[0].mxu0
          %v468 = vadd.f32 0.0, %v467
          %v469 = vpop.f32.mrb[0].mxu0
          %470 = vdwg.mxu0
          %v471 = vmul.f32 %v457, 0.088388346
          %v472 = vmul.f32 %v460, 0.088388346
          %v473 = vmul.f32 %v465, 0.088388346
          %v474 = vmul.f32 %v468, 0.088388346
          %s475 = smul.u32 %s41, 32
          %v476 = vlaneseq
          %v477 = vshrl.u32 %v476, 7
          %v478 = vadd.s32 %v477, 8
          %v479 = vadd.s32 %v477, 16
          %v480 = vadd.s32 %v477, 24
          %v481 = vstv %s475
          %v482 = vadd.s32 %v481, %v477
          %v483 = vadd.s32 %v481, %v478
          %v484 = vadd.s32 %v481, %v479
          %v485 = vadd.s32 %v481, %v480
          %s486 = smul.u32 %s409, 32
          %v487 = vlaneseq
          %v488 = vand.u32 %v487, 127
          %v489 = vstv %s486
          %v490 = vadd.s32 %v489, %v488
          %vm491 = vcmp.le.s32.totalorder %v490, %v482
          %vm492 = vcmp.le.s32.totalorder %v490, %v483
          %vm493 = vcmp.le.s32.totalorder %v490, %v484
          %vm494 = vcmp.le.s32.totalorder %v490, %v485
          %v495 = vsel %vm491, %v471, -inf
          %v496 = vsel %vm492, %v472, -inf
          %v497 = vsel %vm493, %v473, -inf
          %v498 = vsel %vm494, %v474, -inf
          %v499 = vld [vmem:[#allocation2] sm:$0xff]
          %v500 = vld [vmem:[#allocation2 + $0x8] sm:$0xff]
          %v501 = vld [vmem:[#allocation2 + $0x10] sm:$0xff]
          %v502 = vld [vmem:[#allocation2 + $0x18] sm:$0xff]
          %vm503 = vcmask 261120
          %v504 = vsel %vm503, %v495, -inf
          %505 = vmax.xlane.f32.xlu0 %v504
          %v506 = vpop.xlane.xlu0 %505
          %v507 = vsel %vm503, %v496, -inf
          %508 = vmax.xlane.f32.xlu0 %v507
          %v509 = vpop.xlane.xlu0 %508
          %v510 = vsel %vm503, %v497, -inf
          %511 = vmax.xlane.f32.xlu0 %v510
          %v512 = vpop.xlane.xlu0 %511
          %v513 = vsel %vm503, %v498, -inf
          %514 = vmax.xlane.f32.xlu0 %v513
          %v515 = vpop.xlane.xlu0 %514
          %v516 = vmax.f32 %v499, %v506
          %v517 = vmax.f32 %v500, %v509
          %v518 = vmax.f32 %v501, %v512
          %v519 = vmax.f32 %v502, %v515
          %v520 = vsub.f32 %v499, %v516
          %v521 = vsub.f32 %v500, %v517
          %v522 = vsub.f32 %v501, %v518
          %v523 = vsub.f32 %v502, %v519
          %v524 = vmul.f32 %v520, 1.442695
          %v525 = vpow.pop %v524
          %v526 = vmul.f32 %v521, 1.442695
          %v527 = vpow.pop %v526
          %v528 = vmul.f32 %v522, 1.442695
          %v529 = vpow.pop %v528
          %v530 = vmul.f32 %v523, 1.442695
          %v531 = vpow.pop %v530
          %533 = vset.pattern.permute.xlu0 0
          %534 = vperm.xlu0 %533, %v516
          %v535 = vpop.permute.xlu0 %534
          %538 = vset.pattern.permute.xlu0 0
          %539 = vperm.xlu0 %538, %v517
          %v540 = vpop.permute.xlu0 %539
          %543 = vset.pattern.permute.xlu0 0
          %544 = vperm.xlu0 %543, %v518
          %v545 = vpop.permute.xlu0 %544
          %548 = vset.pattern.permute.xlu0 0
          %549 = vperm.xlu0 %548, %v519
          %v550 = vpop.permute.xlu0 %549
          %v552 = vsub.f32 %v495, %v535
          %v553 = vsub.f32 %v496, %v540
          %v554 = vsub.f32 %v497, %v545
          %v555 = vsub.f32 %v498, %v550
          %v556 = vmul.f32 %v552, 1.442695
          %v557 = vpow.pop %v556
          %v558 = vmul.f32 %v553, 1.442695
          %v559 = vpow.pop %v558
          %v560 = vmul.f32 %v554, 1.442695
          %v561 = vpow.pop %v560
          %v562 = vmul.f32 %v555, 1.442695
          %v563 = vpow.pop %v562
          %v564 = vld [vmem:[#allocation3] sm:$0xff]
          %v565 = vld [vmem:[#allocation3 + $0x8] sm:$0xff]
          %v566 = vld [vmem:[#allocation3 + $0x10] sm:$0xff]
          %v567 = vld [vmem:[#allocation3 + $0x18] sm:$0xff]
          %v568 = vmul.f32 %v525, %v564
          %v569 = vmul.f32 %v527, %v565
          %v570 = vmul.f32 %v529, %v566
          %v571 = vmul.f32 %v531, %v567
          %v572 = vsel %vm503, %v557, 0.0
          %573 = vadd.xlane.f32.xlu0 %v572
          %v574 = vpop.xlane.xlu0 %573
          %v575 = vsel %vm503, %v559, 0.0
          %576 = vadd.xlane.f32.xlu0 %v575
          %v577 = vpop.xlane.xlu0 %576
          %v578 = vsel %vm503, %v561, 0.0
          %579 = vadd.xlane.f32.xlu0 %v578
          %v580 = vpop.xlane.xlu0 %579
          %v581 = vsel %vm503, %v563, 0.0
          %582 = vadd.xlane.f32.xlu0 %v581
          %v583 = vpop.xlane.xlu0 %582
          %v584 = vadd.f32 %v568, %v574
          %v585 = vadd.f32 %v569, %v577
          %v586 = vadd.f32 %v570, %v580
          %v587 = vadd.f32 %v571, %v583
          %vm588 = vcmask 7168
          %589 = vst.msk [vmem:[#allocation3] sm:$0xff] %vm588, %v584
          %590 = vst.msk [vmem:[#allocation3 + $0x8] sm:$0xff] %vm588, %v585
          %591 = vst.msk [vmem:[#allocation3 + $0x10] sm:$0xff] %vm588, %v586
          %592 = vst.msk [vmem:[#allocation3 + $0x18] sm:$0xff] %vm588, %v587
          %v593 = vld [vmem:[#allocation4] sm:$0xff]
          %v594 = vld [vmem:[#allocation4 + $0x8] sm:$0xff]
          %v595 = vld [vmem:[#allocation4 + $0x10] sm:$0xff]
          %v596 = vld [vmem:[#allocation4 + $0x18] sm:$0xff]
          %598 = vset.pattern.permute.xlu0 0
          %599 = vperm.xlu0 %598, %v525
          %v600 = vpop.permute.xlu0 %599
          %603 = vset.pattern.permute.xlu0 0
          %604 = vperm.xlu0 %603, %v527
          %v605 = vpop.permute.xlu0 %604
          %608 = vset.pattern.permute.xlu0 0
          %609 = vperm.xlu0 %608, %v529
          %v610 = vpop.permute.xlu0 %609
          %613 = vset.pattern.permute.xlu0 0
          %614 = vperm.xlu0 %613, %v531
          %v615 = vpop.permute.xlu0 %614
          %v617 = vmul.f32 %v600, %v593
          %v618 = vmul.f32 %v605, %v594
          %v619 = vmul.f32 %v610, %v595
          %v620 = vmul.f32 %v615, %v596
          %v621 = vpack.c.bf16 %v559, %v557
          %v622 = vpack.c.bf16 %v563, %v561
          %v623 = vld [vmem:[%s326] sm:$0xff]
          %v624 = vld [vmem:[%s326 + $0x8] sm:$0xff]
          %v625 = vld [vmem:[%s326 + $0x10] sm:$0xff]
          %v626 = vld [vmem:[%s326 + $0x18] sm:$0xff]
          %v627 = vpack.c.bf16 %v624, %v623
          %v628 = vpack.c.bf16 %v626, %v625
          %v630 = vsel %vm503, %v621, 0
          %v633 = vsel %vm503, %v622, 0
          %635 = vmatprep.subr.bf16.mxu0 0
          %636 = vmatpush1.bf16.msra.mxu0 %v627
          %637 = vmatprep.subr.bf16.mxu0 0
          %638 = vmatpush1.bf16.msra.mxu0 %v628
          %639 = vmatprep.subr.bf16.mxu0 0
          %640 = vmatpush1.bf16.msra.mxu0 0
          %641 = vmatprep.subr.bf16.mxu0 0
          %642 = vmatpush1.bf16.msra.mxu0 0
          %643 = vmatprep.subr.bf16.mxu0 0
          %644 = vmatpush1.bf16.msra.mxu0 0
          %645 = vmatprep.subr.bf16.mxu0 0
          %646 = vmatpush1.bf16.msra.mxu0 0
          %647 = vmatprep.subr.bf16.mxu0 0
          %648 = vmatpush1.bf16.msra.mxu0 0
          %649 = vmatprep.subr.bf16.mxu0 0
          %650 = vmatpush1.bf16.msra.mxu0 0
          %651 = vmatprep.subr.bf16.mxu0 0
          %652 = vmatpush1.bf16.msra.mxu0 0
          %653 = vmatprep.subr.bf16.mxu0 0
          %654 = vmatpush1.bf16.msra.mxu0 0
          %655 = vmatprep.subr.bf16.mxu0 0
          %656 = vmatpush1.bf16.msra.mxu0 0
          %657 = vmatprep.subr.bf16.mxu0 0
          %658 = vmatpush1.bf16.msra.mxu0 0
          %659 = vmatprep.subr.bf16.mxu0 0
          %660 = vmatpush1.bf16.msra.mxu0 0
          %661 = vmatprep.subr.bf16.mxu0 0
          %662 = vmatpush1.bf16.msra.mxu0 0
          %663 = vmatprep.subr.bf16.mxu0 0
          %664 = vmatpush1.bf16.msra.mxu0 0
          %665 = vmatprep.subr.bf16.mxu0 0
          %666 = vmatpush1.bf16.msra.mxu0 0
          %667 = vmatprep.mubr.bf16.mxu0 0
          %668 = vmatmul.mubr.bf16.gmra.mrb[0].mxu0 %v630
          %v669 = vpop.f32.mrb[0].mxu0
          %v670 = vadd.f32 0.0, %v669
          %v671 = vpop.f32.mrb[0].mxu0
          %v672 = vpop.f32.mrb[0].mxu0
          %v673 = vadd.f32 0.0, %v672
          %v674 = vpop.f32.mrb[0].mxu0
          %675 = vmatprep.mubr.bf16.mxu0 0
          %676 = vmatmul.mubr.bf16.gmra.mrb[0].mxu0 %v633
          %v677 = vpop.f32.mrb[0].mxu0
          %v678 = vadd.f32 0.0, %v677
          %v679 = vpop.f32.mrb[0].mxu0
          %v680 = vpop.f32.mrb[0].mxu0
          %v681 = vadd.f32 0.0, %v680
          %v682 = vpop.f32.mrb[0].mxu0
          %683 = vdwg.mxu0
          %v684 = vadd.f32 %v617, %v670
          %v685 = vadd.f32 %v618, %v673
          %v686 = vadd.f32 %v619, %v678
          %v687 = vadd.f32 %v620, %v681
          %688 = vst [vmem:[#allocation4] sm:$0xff] %v684
          %689 = vst [vmem:[#allocation4 + $0x8] sm:$0xff] %v685
          %690 = vst [vmem:[#allocation4 + $0x10] sm:$0xff] %v686
          %691 = vst [vmem:[#allocation4 + $0x18] sm:$0xff] %v687
          %692 = vst.msk [vmem:[#allocation2] sm:$0xff] %vm588, %v516
          %693 = vst.msk [vmem:[#allocation2 + $0x8] sm:$0xff] %vm588, %v517
          %694 = vst.msk [vmem:[#allocation2 + $0x10] sm:$0xff] %vm588, %v518
          %695 = vst.msk [vmem:[#allocation2 + $0x18] sm:$0xff] %vm588, %v519
        $region52: #{sparse_attention_forward.1} parent=31 // pred_fallthru
          _
        %p696 = scmp.eq.s32.totalorder %s42, 5
        // Predicated region
        $region53: #{sparse_attention_forward.1} parent=31 // pred_check
          %p697 = pneg %p696
        $region54: #{sparse_attention_forward.1} parent=31 // pred_check_branch
          %699 = sbr.rel (%p697) target = $region56
        $region55: #{sparse_attention_forward.1} parent=31 // pred_region
          %v700 = vld [vmem:[#allocation4] sm:$0xff]
          %v701 = vld [vmem:[#allocation4 + $0x8] sm:$0xff]
          %v702 = vld [vmem:[#allocation4 + $0x10] sm:$0xff]
          %v703 = vld [vmem:[#allocation4 + $0x18] sm:$0xff]
          %v704 = vld [vmem:[#allocation3] sm:$0xff]
          %v705 = vld [vmem:[#allocation3 + $0x8] sm:$0xff]
          %v706 = vld [vmem:[#allocation3 + $0x10] sm:$0xff]
          %v707 = vld [vmem:[#allocation3 + $0x18] sm:$0xff]
          %v708 = vrcp.pop %v704
          %v709 = vrcp.pop %v705
          %v710 = vrcp.pop %v706
          %v711 = vrcp.pop %v707
          %713 = vset.pattern.permute.xlu0 0
          %714 = vperm.xlu0 %713, %v708
          %v715 = vpop.permute.xlu0 %714
          %718 = vset.pattern.permute.xlu0 0
          %719 = vperm.xlu0 %718, %v709
          %v720 = vpop.permute.xlu0 %719
          %723 = vset.pattern.permute.xlu0 0
          %724 = vperm.xlu0 %723, %v710
          %v725 = vpop.permute.xlu0 %724
          %728 = vset.pattern.permute.xlu0 0
          %729 = vperm.xlu0 %728, %v711
          %v730 = vpop.permute.xlu0 %729
          %v732 = vmul.f32 %v700, %v715
          %v733 = vmul.f32 %v701, %v720
          %v734 = vmul.f32 %v702, %v725
          %v735 = vmul.f32 %v703, %v730
          %736 = vst [vmem:[%s358] sm:$0xff] %v732
          %737 = vst [vmem:[%s358 + $0x8] sm:$0xff] %v733
          %738 = vst [vmem:[%s358 + $0x10] sm:$0xff] %v734
          %739 = vst [vmem:[%s358 + $0x18] sm:$0xff] %v735
        $region56: #{sparse_attention_forward.1} parent=31 // pred_fallthru
          _
        %s740 = sand.u32 %s180, 1
        %s741 = scalar_lea.sflag [#allocation10], %s740
        %s742 = sand.u32 %s180, 1
        %s743 = smul.addr %s742, 32
        %s744 = scalar_lea.vmem [#allocation14], %s743
        // Predicated region
        $region57: #{sparse_attention_forward.1} parent=31 // pred_check
          %p745 = pneg %p190
        $region58: #{sparse_attention_forward.1} parent=31 // pred_check_branch
          %747 = sbr.rel (%p745) target = $region60
        $region59: #{sparse_attention_forward.1} parent=31 // pred_region
          %s748 = smul.u32 4, %s41
          %s750 = ssub.s32 512, 512
          %751 = vsyncadd %s741, %s750
          %s752 = smul.addr %s40, 32
          %s753 = sadd.s32 %s748, %s752
          %s754 = smul.addr %s753, 128
          %s755 = scalar_lea.hbm %s5, %s754
          %s756 = sshll.u32 %s744, 4
          %s757 = int_to_ptr.vmem [resolvable:$true] %s756
          %762 = dma.vmem_to_hbm [thread:$0]  %s757, 512, %s755, %s741, 128, 128, 8
        $region60: #{sparse_attention_forward.1} parent=31 // pred_fallthru
          _
      $region32: #{sparse_attention_forward.1} parent=5 // pred_fallthru
        _
      %p763 = scmp.le.s32.totalorder 2, %s30
      // Predicated region
      $region61: #{sparse_attention_forward.1} parent=5 // pred_check
        %p764 = pneg %p763
      $region62: #{sparse_attention_forward.1} parent=5 // pred_check_branch
        %766 = sbr.rel (%p764) target = $region64
      $region63: #{sparse_attention_forward.1} parent=5 // pred_region
        %s767 = ssub.s32 %s30, 2
        // Predicated region
        $region65: #{sparse_attention_forward.1} parent=63 // pred_check
          %p768 = pneg %p196
        $region66: #{sparse_attention_forward.1} parent=63 // pred_check_branch
          %770 = sbr.rel (%p768) target = $region68
        $region67: #{sparse_attention_forward.1} parent=63 // pred_region
          %s771 = sand.u32 %s181, 1
          %s772 = scalar_lea.sflag [#allocation10], %s771
          %s773 = sand.u32 %s181, 1
          %s774 = smul.addr %s773, 32
          %s775 = scalar_lea.vmem [#allocation14], %s774
          %776 = dma.done %s772, 512
        $region68: #{sparse_attention_forward.1} parent=63 // pred_fallthru
          _
      $region64: #{sparse_attention_forward.1} parent=5 // pred_fallthru
        _
    $region6: #{sparse_attention_forward.1} parent=1 // loop_footer
      %s34 = sadd.s32 1, %s30
    $region7: #{sparse_attention_forward.1} parent=1 // loop_footer_branch
      %29 = sbr.rel target = $region3
    $region8: #{sparse_attention_forward.1} parent=1 // loop_exit
      _
    %777 = vsyncpa [#allocation9], 1
    %s778 = scalar_lea.sflag [#allocation9], 1
    %779 = vsyncpa %s778, 1
    %780 = vsyncpa [#allocation12], 1
    %s781 = scalar_lea.sflag [#allocation12], 1
    %782 = vsyncpa %s781, 1
    %783 = vsyncpa [#allocation10], 1
    %s784 = scalar_lea.sflag [#allocation10], 1
    %785 = vsyncpa %s784, 1

</llo_original>
